<compile_context>
chip_gen: v6e
topology: v6e:2x2x1
jax: 0.10.0
libtpu: 0.0.40
codegen_flags: <defaults>
</compile_context>

<pallas_src>
import math

import jax
import jax.numpy as jnp
from jax.experimental import pallas as pl
from jax.experimental.pallas import tpu as pltpu

_CLAMP_MIN = 1e-6
_CLAMP_MAX = 1e6
_LANES = 128
_TARGET_BLOCK_BYTES = 4 * 1024 * 1024     # ~4 MiB per grid step
_VMEM_LIMIT_BYTES = 32 * 1024 * 1024      # 2 in-bufs + 2 out-bufs @ 4 MiB fits easily


def _stddev_ref(x: jax.Array) -> jax.Array:
    """Plain-jnp reference / tail path: sqrt(clip(abs(x), 1e-6, 1e6))."""
    return jnp.sqrt(jnp.clip(jnp.abs(x), _CLAMP_MIN, _CLAMP_MAX)).astype(x.dtype)


def _stddev_activation_kernel(x_ref, o_ref):
    # abs + clip on the VPU, sqrt on the EUP (separate bundle slot) — all
    # hidden behind the HBM<->VMEM DMA; op is purely memory-bound.
    x = x_ref[...]
    o_ref[...] = jnp.sqrt(jnp.clip(jnp.abs(x), _CLAMP_MIN, _CLAMP_MAX)).astype(o_ref.dtype)


def _sublane_multiple(dtype) -> int:
    # Packed-dtype sublane multiples: f32 -> 8, bf16/f16 -> 16, int8/fp8 -> 32.
    itemsize = jnp.dtype(dtype).itemsize
    return {4: 8, 2: 16, 1: 32}.get(itemsize, 8)


def stddev_activation(x: jax.Array) -> jax.Array:
    """sqrt(clamp(abs(x), 1e-6, 1e6)) — semantics of StddevActivation.forward."""
    orig_shape = x.shape
    dtype = x.dtype
    n = math.prod(orig_shape)

    sub = _sublane_multiple(dtype)
    granule = sub * _LANES               # smallest aligned 2-D tile, in elements

    if n < granule:
        # Tiny or empty input: kernel-launch overhead dominates; use plain jnp.
        return _stddev_ref(x)

    flat = x.reshape(-1)                 # metadata-only
    n_bulk = (n // granule) * granule    # aligned bulk handled by the kernel
    m = n_bulk // granule

    # Widen the lane dimension when divisibility allows: larger contiguous
    # DMAs per grid step and a lane-dense output slab (unmasked vst).
    k = 1
    for cand in (16, 8, 4, 2):
        if m % cand == 0:
            k = cand
            break
    lanes = _LANES * k
    rows = n_bulk // lanes               # multiple of `sub` by construction

    # Row-tile sized for ~_TARGET_BLOCK_BYTES per block, sublane-aligned.
    itemsize = jnp.dtype(dtype).itemsize
    br = _TARGET_BLOCK_BYTES // (lanes * itemsize)
    br = max(sub, (br // sub) * sub)
    br = min(br, rows)
    # If the whole slab fits in one block but can be split, use >=2 blocks so
    # the "parallel" grid axis can shard across both TensorCores on v7x.
    if br >= rows and rows >= 2 * sub:
        br = -(-(rows // 2) // sub) * sub
    grid = (pl.cdiv(rows, br),)          # partial last block masked by Pallas

    bulk = flat if n_bulk == n else flat[:n_bulk]
    slab = bulk.reshape(rows, lanes)     # metadata-only

    out = pl.pallas_call(
        _stddev_activation_kernel,
        out_shape=jax.ShapeDtypeStruct((rows, lanes), dtype),
        grid_spec=pltpu.PrefetchScalarGridSpec(
            num_scalar_prefetch=0,
            grid=grid,
            in_specs=[pl.BlockSpec((br, lanes), lambda i: (i, 0))],
            out_specs=pl.BlockSpec((br, lanes), lambda i: (i, 0)),
        ),
        compiler_params=pltpu.CompilerParams(
            dimension_semantics=("parallel",),
            vmem_limit_bytes=_VMEM_LIMIT_BYTES,
        ),
    )(slab)

    if n_bulk == n:
        # Common case: pure metadata reshape back, zero extra HBM copies.
        return out.reshape(orig_shape)

    # Ragged tail (< granule elements): plain jnp, then join.
    tail = _stddev_ref(flat[n_bulk:])
    return jnp.concatenate([out.reshape(-1), tail]).reshape(orig_shape)


if __name__ == "__main__":
    key = jax.random.PRNGKey(0)
    # Small NCHW input consistent with a conv-style pipeline.
    x = jax.random.normal(key, (2, 4, 16, 16), dtype=jnp.float32) * 3.0

    y = stddev_activation(x)
    jax.block_until_ready(y)

    # Reference check in plain JAX (same semantics as the PyTorch module).
    y_ref = jnp.sqrt(jnp.clip(jnp.abs(x), 1e-6, 1e6))
    assert y.shape == x.shape and y.dtype == x.dtype
    assert jnp.allclose(y, y_ref, rtol=1e-6, atol=1e-6)

    print("KERNEL_OK")
</pallas_src>

<mosaic_0001>
module attributes {stable_mosaic.version = 11 : i64} {
  func.func @_stddev_activation_kernel(%arg0: i32, %arg1: memref<8x256xf32, #tpu.memory_space<vmem>>, %arg2: memref<8x256xf32, #tpu.memory_space<vmem>>) attributes {dimension_semantics = [#tpu.dimension_semantics<parallel>], iteration_bounds = array<i64: 1>, scalar_prefetch = 0 : i64, scratch_operands = 0 : i64, tpu.core_type = #tpu.core_type<tc>, window_params = [{transform_indices = @transform_0, window_bounds = array<i64: 8, 256>}, {transform_indices = @transform_1, window_bounds = array<i64: 8, 256>}]} {
    %c0 = arith.constant 0 : index
    %c0_0 = arith.constant 0 : index
    %0 = vector.load %arg1[%c0, %c0_0] : memref<8x256xf32, #tpu.memory_space<vmem>>, vector<8x256xf32>
    %1 = math.absf %0 : vector<8x256xf32>
    %cst = arith.constant 9.99999997E-7 : f32
    %cst_1 = arith.constant 1.000000e+06 : f32
    %2 = vector.broadcast %cst : f32 to vector<8x256xf32>
    %3 = arith.maximumf %2, %1 : vector<8x256xf32>
    %4 = vector.broadcast %cst_1 : f32 to vector<8x256xf32>
    %5 = arith.minimumf %4, %3 : vector<8x256xf32>
    %6 = math.sqrt %5 : vector<8x256xf32>
    %c0_2 = arith.constant 0 : index
    %c0_3 = arith.constant 0 : index
    %7 = vector.load %arg2[%c0_2, %c0_3] : memref<8x256xf32, #tpu.memory_space<vmem>>, vector<8x256xf32>
    tpu.vector_store %arg2[%c0_2, %c0_3], %6 {strides = array<i32>} : memref<8x256xf32, #tpu.memory_space<vmem>>, vector<8x256xf32>,
    return
  }
  func.func @transform_0(%arg0: i32) -> (i32, i32) {
    %c0_i32 = arith.constant 0 : i32
    %c0_i32_0 = arith.constant 0 : i32
    return %arg0, %c0_i32 : i32, i32
  }
  func.func @transform_1(%arg0: i32) -> (i32, i32) {
    %c0_i32 = arith.constant 0 : i32
    %c0_i32_0 = arith.constant 0 : i32
    return %arg0, %c0_i32 : i32, i32
  }
}

</mosaic_0001>

<llo_original>
// kernel: tpu_custom_call.1
$region0: #{tpu_custom_call.1}
  #allocation0 [shape = 'u32[]', space=smem, size = 0x4, offset = 0x4, fixed_abs, tag = 'smem constant byte address 0x4 - core index']
  #allocation1 [shape = 'u32[144,128]{1,0:T(1,128)}', space=vmem, size = 0x12000, scoped, tag = 'internal scratch']
  %s0 = inlined_call_operand.hbm [shape: f32[8,256], index: 0, kind: input, shape index: {}]
  %s1 = inlined_call_operand.hbm [shape: f32[8,256], index: 1, kind: output, shape index: {}]
  %s2 = sld [smem:[#allocation0]]
  $region18: #{tpu_custom_call.1} parent=0
    _
  %s4 = ssub.s32 1, %s2
  %s5 = scalar_select 0, %s4, %s2
  $region1: #{tpu_custom_call.1} parent=0
    #allocation2 [shape = 'u8[8192]{0}', space=vmem, size = 0x2000, scoped, tag = 'input window, operand 0, single buffered']
    #allocation3 [shape = 's32[1]{0}', space=sflag, size = 0x4, scoped, tag = 'scoped memory for tpu_custom_call.1']
    #allocation4 [shape = 's32[1]{0}', space=sflag, size = 0x4, scoped, tag = 'scoped memory for tpu_custom_call.1']
    #allocation5 [shape = 'u8[8192]{0}', space=vmem, size = 0x2000, scoped, tag = 'output window, operand 0, single buffered']
    %6 = vsyncpa [#allocation3], 0
    %7 = vsyncpa [#allocation4], 0
    // Predicated region
    $region2: #{tpu_custom_call.1} parent=1 // pred_check
      _
    $region3: #{tpu_custom_call.1} parent=1 // pred_check_branch
      %9 = sbr.rel (0) target = $region5
    $region4: #{tpu_custom_call.1} parent=1 // pred_region
      %s11 = ssub.s32 256, 256
      %12 = vsyncadd [#allocation3], %s11
      %s14 = sshll.u32 [#allocation2], 4
      %s15 = int_to_ptr.vmem [resolvable:$true] %s14
      %17 = dma.hbm_to_vmem [thread:$0]  %s0, 256, %s15, [#allocation3]
    $region5: #{tpu_custom_call.1} parent=1 // pred_fallthru
      _
    // Predicated region
    $region6: #{tpu_custom_call.1} parent=1 // pred_check
      _
    $region7: #{tpu_custom_call.1} parent=1 // pred_check_branch
      %19 = sbr.rel (0) target = $region9
    $region8: #{tpu_custom_call.1} parent=1 // pred_region
      %20 = dma.done [#allocation3], 256
    $region9: #{tpu_custom_call.1} parent=1 // pred_fallthru
      _
    %v21 = vld [vmem:[#allocation2] sm:$0xff]
    %v22 = vld [vmem:[#allocation2 + $0x8] sm:$0xff]
    %v23 = vand.u32 2147483647, %v21
    %v24 = vand.u32 2147483647, %v22
    %v25 = vmax.f32 %v23, 1e-06
    %v26 = vmax.f32 %v24, 1e-06
    %v27 = vmin.f32 %v25, 1000000.0
    %v28 = vmin.f32 %v26, 1000000.0
    %v29 = vrsqrt.pop %v27
    %v30 = vmul.f32 %v27, %v29
    %vm31 = vcmp.eq.f32.partialorder %v27, inf
    %v32 = vsel %vm31, %v27, %v30
    %vm33 = vcmp.eq.f32.partialorder %v27, 0.0
    %v34 = vand.u32 %v27, 2147483648
    %v35 = vsel %vm33, %v34, %v32
    %v36 = vrsqrt.pop %v28
    %v37 = vmul.f32 %v28, %v36
    %vm38 = vcmp.eq.f32.partialorder %v28, inf
    %v39 = vsel %vm38, %v28, %v37
    %vm40 = vcmp.eq.f32.partialorder %v28, 0.0
    %v41 = vand.u32 %v28, 2147483648
    %v42 = vsel %vm40, %v41, %v39
    %43 = vst [vmem:[#allocation5] sm:$0xff] %v35
    %44 = vst [vmem:[#allocation5 + $0x8] sm:$0xff] %v42
    // Predicated region
    $region10: #{tpu_custom_call.1} parent=1 // pred_check
      _
    $region11: #{tpu_custom_call.1} parent=1 // pred_check_branch
      %46 = sbr.rel (0) target = $region13
    $region12: #{tpu_custom_call.1} parent=1 // pred_region
      %s48 = ssub.s32 256, 256
      %49 = vsyncadd [#allocation4], %s48
      %s51 = sshll.u32 [#allocation5], 4
      %s52 = int_to_ptr.vmem [resolvable:$true] %s51
      %54 = dma.vmem_to_hbm [thread:$0]  %s52, 256, %s1, [#allocation4]
    $region13: #{tpu_custom_call.1} parent=1 // pred_fallthru
      _
    // Predicated region
    $region14: #{tpu_custom_call.1} parent=1 // pred_check
      _
    $region15: #{tpu_custom_call.1} parent=1 // pred_check_branch
      %56 = sbr.rel (0) target = $region17
    $region16: #{tpu_custom_call.1} parent=1 // pred_region
      %57 = dma.done [#allocation4], 256
    $region17: #{tpu_custom_call.1} parent=1 // pred_fallthru
      _
    %58 = vsyncpa [#allocation3], 1
    %59 = vsyncpa [#allocation4], 1

</llo_original>
